<compile_context>
chip_gen: v7x
topology: tpu7x:2x2x1
jax: 0.10.0
libtpu: 0.0.40
codegen_flags: <defaults>
</compile_context>

<pallas_src>
import jax
import jax.numpy as jnp
from jax.experimental import pallas as pl
from jax.experimental.pallas import tpu as pltpu

_N_PAD = 128  # lane-dense padded width for the 2-wide projection


def _location_kernel(h_ref, w_ref, b_ref, noise_ref, loc_ref, mu_ref):
    # h:     [TB, H]       f32
    # w:     [H, 128]      f32 (columns >= 2 are zero)
    # b:     [1, 128]      f32 (columns >= 2 are zero)
    # noise: [TB, 128]     f32 (columns >= 2 are zero)
    # loc/mu outputs: [TB, 128] f32, full-width (lane-dense) stores.
    mu = jnp.dot(h_ref[...], w_ref[...], preferred_element_type=jnp.float32)
    mu = jnp.clip(mu + b_ref[...], -1.0, 1.0)          # clamp(fc(h), -1, +1)
    loc = jnp.clip(mu + noise_ref[...], -1.0, 1.0)     # clamp(mu + noise, -1, +1)
    mu_ref[...] = mu.astype(mu_ref.dtype)
    loc_ref[...] = loc.astype(loc_ref.dtype)


def location_network(recurrent_hidden, fc_weight, fc_bias, noise, *, batch_tile=512):
    """LocationNetwork forward.

    recurrent_hidden: [B, H] f32
    fc_weight:        [2, H] f32  (PyTorch nn.Linear weight layout)
    fc_bias:          [2]    f32
    noise:            [B, 2] f32  (already scaled by std)
    Returns (location, location_mu), each [B, 2] f32.
    """
    B, H = recurrent_hidden.shape

    h = recurrent_hidden.astype(jnp.float32)

    # Host-side lane-dense padding of the tiny projection parameters.
    w_pad = jnp.zeros((H, _N_PAD), jnp.float32).at[:, :2].set(
        jnp.transpose(fc_weight.astype(jnp.float32)))
    b_pad = jnp.zeros((1, _N_PAD), jnp.float32).at[0, :2].set(
        fc_bias.astype(jnp.float32))

    # Batch tiling: one block if B is small, otherwise TB-row tiles
    # (pad B up to a multiple of TB; padded rows are sliced off below).
    if B >= batch_tile:
        tb = batch_tile
        b_padded = ((B + tb - 1) // tb) * tb
    else:
        tb = B
        b_padded = B

    noise_pad = jnp.zeros((b_padded, _N_PAD), jnp.float32).at[:B, :2].set(
        noise.astype(jnp.float32))
    if b_padded != B:
        h = jnp.pad(h, ((0, b_padded - B), (0, 0)))

    n_tiles = b_padded // tb

    loc_pad, mu_pad = pl.pallas_call(
        _location_kernel,
        out_shape=(
            jax.ShapeDtypeStruct((b_padded, _N_PAD), jnp.float32),  # location
            jax.ShapeDtypeStruct((b_padded, _N_PAD), jnp.float32),  # location_mu
        ),
        grid=(n_tiles,),
        in_specs=[
            pl.BlockSpec((tb, H), lambda i: (i, 0)),        # h: tiled over batch
            pl.BlockSpec((H, _N_PAD), lambda i: (0, 0)),    # weight: resident
            pl.BlockSpec((1, _N_PAD), lambda i: (0, 0)),    # bias: resident
            pl.BlockSpec((tb, _N_PAD), lambda i: (i, 0)),   # noise: tiled over batch
        ],
        out_specs=(
            pl.BlockSpec((tb, _N_PAD), lambda i: (i, 0)),
            pl.BlockSpec((tb, _N_PAD), lambda i: (i, 0)),
        ),
        compiler_params=pltpu.CompilerParams(
            dimension_semantics=("parallel",),
        ),
    )(h, w_pad, b_pad, noise_pad)

    # Slice the real 2-wide columns (and any batch padding) off outside.
    return loc_pad[:B, :2], mu_pad[:B, :2]


if __name__ == "__main__":
    B = 2
    HIDDEN = 32
    STD = 0.1

    key = jax.random.PRNGKey(0)
    k_in, k_w, k_b, k_noise = jax.random.split(key, 4)

    # Deterministic synthetic parameters (PyTorch nn.Linear layout: [2, H]).
    recurrent_hidden = jax.random.normal(k_in, (B, HIDDEN), dtype=jnp.float32)
    fc_weight = jax.random.normal(k_w, (2, HIDDEN), dtype=jnp.float32) * (1.0 / HIDDEN**0.5)
    fc_bias = jax.random.normal(k_b, (2,), dtype=jnp.float32) * 0.01
    # noise.data.normal_(mean=0, std=std)
    noise = jax.random.normal(k_noise, (B, 2), dtype=jnp.float32) * STD

    location, location_mu = location_network(recurrent_hidden, fc_weight, fc_bias, noise)
    jax.block_until_ready((location, location_mu))

    # Reference check in plain JAX (same math, no Pallas).
    mu_ref = jnp.clip(recurrent_hidden @ fc_weight.T + fc_bias, -1.0, 1.0)
    loc_ref = jnp.clip(mu_ref + noise, -1.0, 1.0)
    assert location_mu.shape == (B, 2) and location.shape == (B, 2)
    assert jnp.allclose(location_mu, mu_ref, atol=1e-5), "mu mismatch"
    assert jnp.allclose(location, loc_ref, atol=1e-5), "location mismatch"

    print("KERNEL_OK")
</pallas_src>

<mosaic_0001>
module attributes {stable_mosaic.version = 11 : i64} {
  func.func @_location_kernel(%arg0: i32, %arg1: memref<2x32xf32, #tpu.memory_space<vmem>>, %arg2: memref<32x128xf32, #tpu.memory_space<vmem>>, %arg3: memref<1x128xf32, #tpu.memory_space<vmem>>, %arg4: memref<2x128xf32, #tpu.memory_space<vmem>>, %arg5: memref<2x128xf32, #tpu.memory_space<vmem>>, %arg6: memref<2x128xf32, #tpu.memory_space<vmem>>) attributes {dimension_semantics = [#tpu.dimension_semantics<parallel>], iteration_bounds = array<i64: 1>, scalar_prefetch = 0 : i64, scratch_operands = 0 : i64, tpu.core_type = #tpu.core_type<tc>, window_params = [{transform_indices = @transform_0, window_bounds = array<i64: 2, 32>}, {pipeline_mode = #tpu.pipeline_mode<synchronous>, transform_indices = @transform_1, window_bounds = array<i64: 32, 128>}, {pipeline_mode = #tpu.pipeline_mode<synchronous>, transform_indices = @transform_2, window_bounds = array<i64: 1, 128>}, {transform_indices = @transform_3, window_bounds = array<i64: 2, 128>}, {transform_indices = @transform_4, window_bounds = array<i64: 2, 128>}, {transform_indices = @transform_5, window_bounds = array<i64: 2, 128>}]} {
    %c0 = arith.constant 0 : index
    %c0_0 = arith.constant 0 : index
    %0 = vector.load %arg1[%c0, %c0_0] : memref<2x32xf32, #tpu.memory_space<vmem>>, vector<2x32xf32>
    %c0_1 = arith.constant 0 : index
    %c0_2 = arith.constant 0 : index
    %1 = vector.load %arg2[%c0_1, %c0_2] : memref<32x128xf32, #tpu.memory_space<vmem>>, vector<32x128xf32>
    %cst = arith.constant dense<0.000000e+00> : vector<2x128xf32>
    %2 = tpu.matmul %0, %1, %cst {dimension_numbers = #tpu.dot_dimension_numbers<[1], [0], [0], [1], [0, 0, 1, 1], [], []>} : vector<2x32xf32>, vector<32x128xf32>, vector<2x128xf32> -> vector<2x128xf32>
    %c0_3 = arith.constant 0 : index
    %c0_4 = arith.constant 0 : index
    %3 = vector.load %arg3[%c0_3, %c0_4] : memref<1x128xf32, #tpu.memory_space<vmem>>, vector<1x128xf32>
    %4 = vector.broadcast %3 : vector<1x128xf32> to vector<2x128xf32>
    %5 = arith.addf %2, %4 : vector<2x128xf32>
    %cst_5 = arith.constant -1.000000e+00 : f32
    %cst_6 = arith.constant 1.000000e+00 : f32
    %6 = vector.broadcast %cst_5 : f32 to vector<2x128xf32>
    %7 = arith.maximumf %6, %5 : vector<2x128xf32>
    %8 = vector.broadcast %cst_6 : f32 to vector<2x128xf32>
    %9 = arith.minimumf %8, %7 : vector<2x128xf32>
    %c0_7 = arith.constant 0 : index
    %c0_8 = arith.constant 0 : index
    %10 = vector.load %arg4[%c0_7, %c0_8] : memref<2x128xf32, #tpu.memory_space<vmem>>, vector<2x128xf32>
    %11 = arith.addf %9, %10 : vector<2x128xf32>
    %cst_9 = arith.constant -1.000000e+00 : f32
    %cst_10 = arith.constant 1.000000e+00 : f32
    %12 = vector.broadcast %cst_9 : f32 to vector<2x128xf32>
    %13 = arith.maximumf %12, %11 : vector<2x128xf32>
    %14 = vector.broadcast %cst_10 : f32 to vector<2x128xf32>
    %15 = arith.minimumf %14, %13 : vector<2x128xf32>
    %c0_11 = arith.constant 0 : index
    %c0_12 = arith.constant 0 : index
    %16 = vector.load %arg6[%c0_11, %c0_12] : memref<2x128xf32, #tpu.memory_space<vmem>>, vector<2x128xf32>
    tpu.vector_store %arg6[%c0_11, %c0_12], %9 {strides = array<i32>} : memref<2x128xf32, #tpu.memory_space<vmem>>, vector<2x128xf32>,
    %c0_13 = arith.constant 0 : index
    %c0_14 = arith.constant 0 : index
    %17 = vector.load %arg5[%c0_13, %c0_14] : memref<2x128xf32, #tpu.memory_space<vmem>>, vector<2x128xf32>
    tpu.vector_store %arg5[%c0_13, %c0_14], %15 {strides = array<i32>} : memref<2x128xf32, #tpu.memory_space<vmem>>, vector<2x128xf32>,
    return
  }
  func.func @transform_0(%arg0: i32) -> (i32, i32) {
    %c0_i32 = arith.constant 0 : i32
    %c0_i32_0 = arith.constant 0 : i32
    return %arg0, %c0_i32 : i32, i32
  }
  func.func @transform_1(%arg0: i32) -> (i32, i32) {
    %c0_i32 = arith.constant 0 : i32
    %c0_i32_0 = arith.constant 0 : i32
    %c0_i32_1 = arith.constant 0 : i32
    return %c0_i32, %c0_i32_0 : i32, i32
  }
  func.func @transform_2(%arg0: i32) -> (i32, i32) {
    %c0_i32 = arith.constant 0 : i32
    %c0_i32_0 = arith.constant 0 : i32
    %c0_i32_1 = arith.constant 0 : i32
    return %c0_i32, %c0_i32_0 : i32, i32
  }
  func.func @transform_3(%arg0: i32) -> (i32, i32) {
    %c0_i32 = arith.constant 0 : i32
    %c0_i32_0 = arith.constant 0 : i32
    return %arg0, %c0_i32 : i32, i32
  }
  func.func @transform_4(%arg0: i32) -> (i32, i32) {
    %c0_i32 = arith.constant 0 : i32
    %c0_i32_0 = arith.constant 0 : i32
    return %arg0, %c0_i32 : i32, i32
  }
  func.func @transform_5(%arg0: i32) -> (i32, i32) {
    %c0_i32 = arith.constant 0 : i32
    %c0_i32_0 = arith.constant 0 : i32
    return %arg0, %c0_i32 : i32, i32
  }
}

</mosaic_0001>

<llo_original>
// kernel: tpu_custom_call.1
$region0: #{tpu_custom_call.1}
  #allocation0 [shape = 'u32[]', space=smem, size = 0x4, offset = 0x4, fixed_abs, tag = 'smem constant byte address 0x4 - core index']
  #allocation1 [shape = 'u32[144,128]{1,0:T(1,128)}', space=vmem, size = 0x12000, scoped, tag = 'internal scratch']
  %s0 = inlined_call_operand.hbm [shape: f32[2,32], index: 0, kind: input, shape index: {}]
  %s1 = inlined_call_operand.hbm [shape: f32[32,128], index: 1, kind: input, shape index: {}]
  %s2 = inlined_call_operand.vmem [shape: f32[1,128], index: 2, kind: input, shape index: {}]
  %s3 = inlined_call_operand.vmem [shape: f32[2,128], index: 3, kind: input, shape index: {}]
  %s4 = inlined_call_operand.hbm [shape: f32[2,128], index: 4, kind: output, shape index: {0}]
  %s5 = inlined_call_operand.hbm [shape: f32[2,128], index: 5, kind: output, shape index: {1}]
  %6 = xla_tuple %s4, %s5
  %s7 = sld [smem:[#allocation0]]
  $region42: #{tpu_custom_call.1} parent=0
    _
  %s9 = ssub.s32 1, %s7
  %s10 = scalar_select 0, %s9, %s7
  $region1: #{tpu_custom_call.1} parent=0
    #allocation2 [shape = 'u8[1024]{0}', space=vmem, size = 0x400, scoped, tag = 'input window, operand 0, single buffered']
    #allocation3 [shape = 's32[1]{0}', space=sflag, size = 0x4, scoped, tag = 'scoped memory for tpu_custom_call.1']
    #allocation4 [shape = 's32[1]{0}', space=sflag, size = 0x4, scoped, tag = 'scoped memory for tpu_custom_call.1']
    #allocation5 [shape = 'u8[16384]{0}', space=vmem, size = 0x4000, scoped, tag = 'input window, operand 1, single buffered']
    #allocation6 [shape = 's32[1]{0}', space=sflag, size = 0x4, scoped, tag = 'scoped memory for tpu_custom_call.1']
    #allocation7 [shape = 'u8[1024]{0}', space=vmem, size = 0x400, scoped, tag = 'output window, operand 0, single buffered']
    #allocation8 [shape = 'u8[1024]{0}', space=vmem, size = 0x400, scoped, tag = 'output window, operand 1, single buffered']
    #allocation9 [shape = 's32[1]{0}', space=sflag, size = 0x4, scoped, tag = 'scoped memory for tpu_custom_call.1']
    %11 = vsyncpa [#allocation3], 0
    %12 = vsyncpa [#allocation6], 0
    %13 = vsyncpa [#allocation4], 0
    %14 = vsyncpa [#allocation9], 0
    // Predicated region
    $region2: #{tpu_custom_call.1} parent=1 // pred_check
      _
    $region3: #{tpu_custom_call.1} parent=1 // pred_check_branch
      %16 = sbr.rel (0) target = $region5
    $region4: #{tpu_custom_call.1} parent=1 // pred_region
      %s18 = ssub.s32 32, 32
      %19 = vsyncadd [#allocation3], %s18
      %s21 = sshll.u32 [#allocation2], 4
      %s22 = int_to_ptr.vmem [resolvable:$true] %s21
      %24 = dma.hbm_to_vmem [thread:$0]  %s0, 32, %s22, [#allocation3]
    $region5: #{tpu_custom_call.1} parent=1 // pred_fallthru
      _
    // Predicated region
    $region6: #{tpu_custom_call.1} parent=1 // pred_check
      _
    $region7: #{tpu_custom_call.1} parent=1 // pred_check_branch
      %26 = sbr.rel (0) target = $region9
    $region8: #{tpu_custom_call.1} parent=1 // pred_region
      %s28 = ssub.s32 512, 512
      %29 = vsyncadd [#allocation6], %s28
      %s30 = sshll.u32 [#allocation5], 4
      %s31 = int_to_ptr.vmem [resolvable:$true] %s30
      %36 = dma.hbm_to_vmem [thread:$0]  %s1, 512, %s31, [#allocation6], 128, 128, 8
    $region9: #{tpu_custom_call.1} parent=1 // pred_fallthru
      _
    // Predicated region
    $region10: #{tpu_custom_call.1} parent=1 // pred_check
      _
    $region11: #{tpu_custom_call.1} parent=1 // pred_check_branch
      %38 = sbr.rel (0) target = $region13
    $region12: #{tpu_custom_call.1} parent=1 // pred_region
      _
    $region13: #{tpu_custom_call.1} parent=1 // pred_fallthru
      _
    // Predicated region
    $region14: #{tpu_custom_call.1} parent=1 // pred_check
      _
    $region15: #{tpu_custom_call.1} parent=1 // pred_check_branch
      %40 = sbr.rel (0) target = $region17
    $region16: #{tpu_custom_call.1} parent=1 // pred_region
      _
    $region17: #{tpu_custom_call.1} parent=1 // pred_fallthru
      _
    // Predicated region
    $region18: #{tpu_custom_call.1} parent=1 // pred_check
      _
    $region19: #{tpu_custom_call.1} parent=1 // pred_check_branch
      %42 = sbr.rel (0) target = $region21
    $region20: #{tpu_custom_call.1} parent=1 // pred_region
      %43 = dma.done [#allocation3], 32
    $region21: #{tpu_custom_call.1} parent=1 // pred_fallthru
      _
    // Predicated region
    $region22: #{tpu_custom_call.1} parent=1 // pred_check
      _
    $region23: #{tpu_custom_call.1} parent=1 // pred_check_branch
      %45 = sbr.rel (0) target = $region25
    $region24: #{tpu_custom_call.1} parent=1 // pred_region
      %46 = dma.done [#allocation6], 512
    $region25: #{tpu_custom_call.1} parent=1 // pred_fallthru
      _
    %v47 = vld [vmem:[#allocation2] sm:$0x3]
    %v48 = vld [vmem:[#allocation5] sm:$0xff]
    %v49 = vld [vmem:[#allocation5 + $0x8] sm:$0xff]
    %v50 = vld [vmem:[#allocation5 + $0x10] sm:$0xff]
    %v51 = vld [vmem:[#allocation5 + $0x18] sm:$0xff]
    %v52 = vld [vmem:[%s2] sm:$0x1]
    %v54 = vlaneseq
    %v55 = vshrl.u32 %v54, 7
    %v56 = vsub.s32 0, %v55
    %v57 = vrot.slane %v52, %v56
    %vm59 = vcmask 261120
    %v61 = vsel %vm59, %v47, 0
    %63 = vmatprep.subr.mxu0 0.0
    %64 = vmatpush1.msra.mxu0 %v48
    %65 = vmatprep.subr.mxu0 0.0
    %66 = vmatpush1.msra.mxu0 %v49
    %67 = vmatprep.subr.mxu0 0.0
    %68 = vmatpush1.msra.mxu0 %v50
    %69 = vmatprep.subr.mxu0 0.0
    %70 = vmatpush1.msra.mxu0 %v51
    %71 = vmatprep.subr.mxu0 0.0
    %72 = vmatpush1.msra.mxu0 0.0
    %73 = vmatprep.subr.mxu0 0.0
    %74 = vmatpush1.msra.mxu0 0.0
    %75 = vmatprep.subr.mxu0 0.0
    %76 = vmatpush1.msra.mxu0 0.0
    %77 = vmatprep.subr.mxu0 0.0
    %78 = vmatpush1.msra.mxu0 0.0
    %79 = vmatprep.subr.mxu0 0.0
    %80 = vmatpush1.msra.mxu0 0.0
    %81 = vmatprep.subr.mxu0 0.0
    %82 = vmatpush1.msra.mxu0 0.0
    %83 = vmatprep.subr.mxu0 0.0
    %84 = vmatpush1.msra.mxu0 0.0
    %85 = vmatprep.subr.mxu0 0.0
    %86 = vmatpush1.msra.mxu0 0.0
    %87 = vmatprep.subr.mxu0 0.0
    %88 = vmatpush1.msra.mxu0 0.0
    %89 = vmatprep.subr.mxu0 0.0
    %90 = vmatpush1.msra.mxu0 0.0
    %91 = vmatprep.subr.mxu0 0.0
    %92 = vmatpush1.msra.mxu0 0.0
    %93 = vmatprep.subr.mxu0 0.0
    %94 = vmatpush1.msra.mxu0 0.0
    %95 = vmatprep.subr.mxu0 0.0
    %96 = vmatpush1.msra.mxu0 0.0
    %97 = vmatprep.subr.mxu0 0.0
    %98 = vmatpush1.msra.mxu0 0.0
    %99 = vmatprep.subr.mxu0 0.0
    %100 = vmatpush1.msra.mxu0 0.0
    %101 = vmatprep.subr.mxu0 0.0
    %102 = vmatpush1.msra.mxu0 0.0
    %103 = vmatprep.subr.mxu0 0.0
    %104 = vmatpush1.msra.mxu0 0.0
    %105 = vmatprep.subr.mxu0 0.0
    %106 = vmatpush1.msra.mxu0 0.0
    %107 = vmatprep.subr.mxu0 0.0
    %108 = vmatpush1.msra.mxu0 0.0
    %109 = vmatprep.subr.mxu0 0.0
    %110 = vmatpush1.msra.mxu0 0.0
    %111 = vmatprep.subr.mxu0 0.0
    %112 = vmatpush1.msra.mxu0 0.0
    %113 = vmatprep.subr.mxu0 0.0
    %114 = vmatpush1.msra.mxu0 0.0
    %115 = vmatprep.subr.mxu0 0.0
    %116 = vmatpush1.msra.mxu0 0.0
    %117 = vmatprep.subr.mxu0 0.0
    %118 = vmatpush1.msra.mxu0 0.0
    %119 = vmatprep.subr.mxu0 0.0
    %120 = vmatpush1.msra.mxu0 0.0
    %121 = vmatprep.subr.mxu0 0.0
    %122 = vmatpush1.msra.mxu0 0.0
    %123 = vmatprep.subr.mxu0 0.0
    %124 = vmatpush1.msra.mxu0 0.0
    %125 = vmatprep.subr.mxu0 0.0
    %126 = vmatpush1.msra.mxu0 0.0
    %127 = vmatprep.mubr.f32.mxu0 0.0
    %128 = vmatmul.mubr.f32.gmra.mrb[0].mxu0 %v61
    %v129 = vpop.f32.mrb[0].mxu0
    %v130 = vadd.f32 %v57, %v129
    %v131 = vpop.f32.mrb[0].mxu0
    %132 = vdwg.mxu0
    %v133 = vmax.f32 %v130, -1.0
    %v134 = vmin.f32 %v133, 1.0
    %v135 = vld [vmem:[%s3] sm:$0x3]
    %v136 = vadd.f32 %v134, %v135
    %v137 = vmax.f32 %v136, -1.0
    %v138 = vmin.f32 %v137, 1.0
    %139 = vst [vmem:[#allocation8] sm:$0x3] %v134
    %140 = vst [vmem:[#allocation7] sm:$0x3] %v138
    // Predicated region
    $region26: #{tpu_custom_call.1} parent=1 // pred_check
      _
    $region27: #{tpu_custom_call.1} parent=1 // pred_check_branch
      %142 = sbr.rel (0) target = $region29
    $region28: #{tpu_custom_call.1} parent=1 // pred_region
      %s144 = ssub.s32 32, 32
      %145 = vsyncadd [#allocation4], %s144
      %s147 = sshll.u32 [#allocation7], 4
      %s148 = int_to_ptr.vmem [resolvable:$true] %s147
      %150 = dma.vmem_to_hbm [thread:$0]  %s148, 32, %s4, [#allocation4]
    $region29: #{tpu_custom_call.1} parent=1 // pred_fallthru
      _
    // Predicated region
    $region30: #{tpu_custom_call.1} parent=1 // pred_check
      _
    $region31: #{tpu_custom_call.1} parent=1 // pred_check_branch
      %152 = sbr.rel (0) target = $region33
    $region32: #{tpu_custom_call.1} parent=1 // pred_region
      %s154 = ssub.s32 32, 32
      %155 = vsyncadd [#allocation9], %s154
      %s157 = sshll.u32 [#allocation8], 4
      %s158 = int_to_ptr.vmem [resolvable:$true] %s157
      %160 = dma.vmem_to_hbm [thread:$0]  %s158, 32, %s5, [#allocation9]
    $region33: #{tpu_custom_call.1} parent=1 // pred_fallthru
      _
    // Predicated region
    $region34: #{tpu_custom_call.1} parent=1 // pred_check
      _
    $region35: #{tpu_custom_call.1} parent=1 // pred_check_branch
      %162 = sbr.rel (0) target = $region37
    $region36: #{tpu_custom_call.1} parent=1 // pred_region
      %163 = dma.done [#allocation4], 32
    $region37: #{tpu_custom_call.1} parent=1 // pred_fallthru
      _
    // Predicated region
    $region38: #{tpu_custom_call.1} parent=1 // pred_check
      _
    $region39: #{tpu_custom_call.1} parent=1 // pred_check_branch
      %165 = sbr.rel (0) target = $region41
    $region40: #{tpu_custom_call.1} parent=1 // pred_region
      %166 = dma.done [#allocation9], 32
    $region41: #{tpu_custom_call.1} parent=1 // pred_fallthru
      _
    %167 = vsyncpa [#allocation3], 1
    %168 = vsyncpa [#allocation6], 1
    %169 = vsyncpa [#allocation4], 1
    %170 = vsyncpa [#allocation9], 1

</llo_original>
